<compile_context>
chip_gen: v7x
topology: tpu7x:2x2x1
jax: 0.10.0
libtpu: 0.0.40
codegen_flags: <defaults>
</compile_context>

<pallas_src>
import numpy as np
import jax
import jax.numpy as jnp
from jax.experimental import pallas as pl
from jax.experimental.pallas import tpu as pltpu

ALPHA = 4


def _slow_indices(T: int, n: int) -> np.ndarray:
    """torch.linspace(0, T-1, n).long(): float32 linspace then truncation."""
    if n <= 0:
        return np.zeros((0,), dtype=np.int64)
    if n == 1:
        return np.zeros((1,), dtype=np.int64)
    # Emulate float32 arithmetic (torch's default dtype) for the linspace.
    step = (np.float32(T - 1) - np.float32(0.0)) / np.float32(n - 1)
    vals = np.float32(0.0) + np.arange(n, dtype=np.float32) * step
    idx = vals.astype(np.int64)          # .long() truncates toward zero
    # Safety clamp: the HBM->HBM DMA source index has no hardware bounds check.
    return np.clip(idx, 0, T - 1)


def _make_pack_slow_kernel(slow_idx):
    slow_idx = tuple(int(i) for i in slow_idx)

    def kernel(frames_hbm, out_hbm, sems):
        # frames_hbm: (C, T, HW) in HBM;  out_hbm: (C, T_slow, HW) in HBM.
        # Issue every HBM->HBM copy up front (all in flight), then wait.
        copies = []
        for t, src_t in enumerate(slow_idx):   # static -> unrolled, immediates
            cp = pltpu.make_async_copy(
                frames_hbm.at[:, pl.ds(src_t, 1), :],
                out_hbm.at[:, pl.ds(t, 1), :],
                sems.at[t],
            )
            cp.start()
            copies.append(cp)
        for cp in copies:
            cp.wait()

    return kernel


def slow_pathway_gather(frames: jax.Array, slow_idx: np.ndarray) -> jax.Array:
    """Gather frames[:, slow_idx, :, :] via direct HBM->HBM DMA.

    frames  : (C, T, H, W)
    slow_idx: static numpy int array of temporal indices, 0 <= idx < T
    returns : (C, T_slow, H, W)
    """
    C, T, H, W = frames.shape
    T_slow = int(slow_idx.shape[0])
    HW = H * W

    # Free reshape: each source frame becomes C contiguous rows of HW elements
    # -> long contiguous DMA descriptors.
    frames3 = frames.reshape(C, T, HW)

    out3 = pl.pallas_call(
        _make_pack_slow_kernel(slow_idx),
        out_shape=jax.ShapeDtypeStruct((C, T_slow, HW), frames.dtype),
        in_specs=[pl.BlockSpec(memory_space=pl.ANY)],   # raw HBM ref, no auto-DMA
        out_specs=pl.BlockSpec(memory_space=pl.ANY),    # write via DMA only
        scratch_shapes=[pltpu.SemaphoreType.DMA((T_slow,))],
    )(frames3)

    return out3.reshape(C, T_slow, H, W)


def pack_pathway(frames: jax.Array):
    """JAX/Pallas equivalent of PackPathway.forward.

    frames: (C, T, H, W).  Returns [slow_pathway, fast_pathway].
    Pure data movement — works in the caller's dtype (uint8/bf16/f32).
    """
    C, T, H, W = frames.shape
    fast_pathway = frames  # identity, same as PyTorch

    n_slow = T // ALPHA
    if n_slow == 0:
        # torch.index_select with an empty index -> empty slow pathway.
        return [jnp.zeros((C, 0, H, W), frames.dtype), fast_pathway]

    idx_np = _slow_indices(T, n_slow)
    assert idx_np.min() >= 0 and idx_np.max() < T

    slow_pathway = slow_pathway_gather(frames, idx_np)
    return [slow_pathway, fast_pathway]


if __name__ == "__main__":
    key = jax.random.PRNGKey(0)
    C, T, H, W = 3, 8, 16, 16  # small clip: channels, frames, height, width
    frames = jax.random.normal(key, (C, T, H, W), dtype=jnp.float32)

    slow, fast = pack_pathway(frames)
    jax.block_until_ready(slow)
    jax.block_until_ready(fast)

    # Reference check (pure JAX) of the index_select semantics.
    n_slow = T // ALPHA
    ref_idx = _slow_indices(T, n_slow)
    ref_slow = jnp.take(frames, jnp.asarray(ref_idx, dtype=jnp.int32), axis=1)
    assert slow.shape == (C, n_slow, H, W)
    assert fast.shape == (C, T, H, W)
    assert jnp.array_equal(slow, ref_slow)
    assert jnp.array_equal(fast, frames)

    print("KERNEL_OK")
</pallas_src>

<mosaic_0001>
module attributes {stable_mosaic.version = 11 : i64} {
  func.func @kernel(%arg0: memref<3x8x256xf32, #tpu.memory_space<any>>, %arg1: memref<3x2x256xf32, #tpu.memory_space<any>>, %arg2: memref<2x!tpu.dma_semaphore, #tpu.memory_space<semaphore_mem>>) attributes {dimension_semantics = [], scalar_prefetch = 0 : i64, scratch_operands = 1 : i64, tpu.core_type = #tpu.core_type<tc>} {
    %c0_i32 = arith.constant 0 : i32
    %c0_i32_0 = arith.constant 0 : i32
    %c0_i32_1 = arith.constant 0 : i32
    %c0_i32_2 = arith.constant 0 : i32
    %0 = tpu.memref_slice %arg0[%c0_i32_0, %c0_i32_1, %c0_i32_2] : memref<3x8x256xf32, #tpu.memory_space<any>> -> memref<3x1x256xf32, #tpu.memory_space<any>>
    %c0_i32_3 = arith.constant 0 : i32
    %c0_i32_4 = arith.constant 0 : i32
    %c0_i32_5 = arith.constant 0 : i32
    %1 = tpu.memref_slice %arg1[%c0_i32_3, %c0_i32_4, %c0_i32_5] : memref<3x2x256xf32, #tpu.memory_space<any>> -> memref<3x1x256xf32, #tpu.memory_space<any>>
    %2 = tpu.memref_slice %arg2[%c0_i32] : memref<2x!tpu.dma_semaphore, #tpu.memory_space<semaphore_mem>> -> memref<1x!tpu.dma_semaphore, #tpu.memory_space<semaphore_mem>>
    %3 = tpu.memref_squeeze %2 : memref<1x!tpu.dma_semaphore, #tpu.memory_space<semaphore_mem>> -> memref<!tpu.dma_semaphore, #tpu.memory_space<semaphore_mem>>
    tpu.enqueue_dma source(%0 : memref<3x1x256xf32, #tpu.memory_space<any>>) target(%1 : memref<3x1x256xf32, #tpu.memory_space<any>>) target_semaphore(%3 : memref<!tpu.dma_semaphore, #tpu.memory_space<semaphore_mem>>)
    %c1_i32 = arith.constant 1 : i32
    %c0_i32_6 = arith.constant 0 : i32
    %c7_i32 = arith.constant 7 : i32
    %c0_i32_7 = arith.constant 0 : i32
    %4 = tpu.memref_slice %arg0[%c0_i32_6, %c7_i32, %c0_i32_7] : memref<3x8x256xf32, #tpu.memory_space<any>> -> memref<3x1x256xf32, #tpu.memory_space<any>>
    %c0_i32_8 = arith.constant 0 : i32
    %c1_i32_9 = arith.constant 1 : i32
    %c0_i32_10 = arith.constant 0 : i32
    %5 = tpu.memref_slice %arg1[%c0_i32_8, %c1_i32_9, %c0_i32_10] : memref<3x2x256xf32, #tpu.memory_space<any>> -> memref<3x1x256xf32, #tpu.memory_space<any>>
    %6 = tpu.memref_slice %arg2[%c1_i32] : memref<2x!tpu.dma_semaphore, #tpu.memory_space<semaphore_mem>> -> memref<1x!tpu.dma_semaphore, #tpu.memory_space<semaphore_mem>>
    %7 = tpu.memref_squeeze %6 : memref<1x!tpu.dma_semaphore, #tpu.memory_space<semaphore_mem>> -> memref<!tpu.dma_semaphore, #tpu.memory_space<semaphore_mem>>
    tpu.enqueue_dma source(%4 : memref<3x1x256xf32, #tpu.memory_space<any>>) target(%5 : memref<3x1x256xf32, #tpu.memory_space<any>>) target_semaphore(%7 : memref<!tpu.dma_semaphore, #tpu.memory_space<semaphore_mem>>)
    %c0_i32_11 = arith.constant 0 : i32
    %c0_i32_12 = arith.constant 0 : i32
    %c0_i32_13 = arith.constant 0 : i32
    %c0_i32_14 = arith.constant 0 : i32
    %8 = tpu.memref_slice %arg0[%c0_i32_12, %c0_i32_13, %c0_i32_14] : memref<3x8x256xf32, #tpu.memory_space<any>> -> memref<3x1x256xf32, #tpu.memory_space<any>>
    %c0_i32_15 = arith.constant 0 : i32
    %c0_i32_16 = arith.constant 0 : i32
    %c0_i32_17 = arith.constant 0 : i32
    %9 = tpu.memref_slice %arg1[%c0_i32_15, %c0_i32_16, %c0_i32_17] : memref<3x2x256xf32, #tpu.memory_space<any>> -> memref<3x1x256xf32, #tpu.memory_space<any>>
    %10 = tpu.memref_slice %arg2[%c0_i32_11] : memref<2x!tpu.dma_semaphore, #tpu.memory_space<semaphore_mem>> -> memref<1x!tpu.dma_semaphore, #tpu.memory_space<semaphore_mem>>
    %11 = tpu.memref_squeeze %10 : memref<1x!tpu.dma_semaphore, #tpu.memory_space<semaphore_mem>> -> memref<!tpu.dma_semaphore, #tpu.memory_space<semaphore_mem>>
    tpu.wait_dma2 semaphore(%11 : memref<!tpu.dma_semaphore, #tpu.memory_space<semaphore_mem>>) src(%8 : memref<3x1x256xf32, #tpu.memory_space<any>>) dst(%9 : memref<3x1x256xf32, #tpu.memory_space<any>>)
    %c1_i32_18 = arith.constant 1 : i32
    %c0_i32_19 = arith.constant 0 : i32
    %c7_i32_20 = arith.constant 7 : i32
    %c0_i32_21 = arith.constant 0 : i32
    %12 = tpu.memref_slice %arg0[%c0_i32_19, %c7_i32_20, %c0_i32_21] : memref<3x8x256xf32, #tpu.memory_space<any>> -> memref<3x1x256xf32, #tpu.memory_space<any>>
    %c0_i32_22 = arith.constant 0 : i32
    %c1_i32_23 = arith.constant 1 : i32
    %c0_i32_24 = arith.constant 0 : i32
    %13 = tpu.memref_slice %arg1[%c0_i32_22, %c1_i32_23, %c0_i32_24] : memref<3x2x256xf32, #tpu.memory_space<any>> -> memref<3x1x256xf32, #tpu.memory_space<any>>
    %14 = tpu.memref_slice %arg2[%c1_i32_18] : memref<2x!tpu.dma_semaphore, #tpu.memory_space<semaphore_mem>> -> memref<1x!tpu.dma_semaphore, #tpu.memory_space<semaphore_mem>>
    %15 = tpu.memref_squeeze %14 : memref<1x!tpu.dma_semaphore, #tpu.memory_space<semaphore_mem>> -> memref<!tpu.dma_semaphore, #tpu.memory_space<semaphore_mem>>
    tpu.wait_dma2 semaphore(%15 : memref<!tpu.dma_semaphore, #tpu.memory_space<semaphore_mem>>) src(%12 : memref<3x1x256xf32, #tpu.memory_space<any>>) dst(%13 : memref<3x1x256xf32, #tpu.memory_space<any>>)
    return
  }
}

</mosaic_0001>

<llo_original>
// kernel: tpu_custom_call.1
$region0: #{tpu_custom_call.1}
  #allocation0 [shape = 'u32[]', space=smem, size = 0x4, offset = 0x4, fixed_abs, tag = 'smem constant byte address 0x4 - core index']
  #allocation1 [shape = 'u32[144,128]{1,0:T(1,128)}', space=vmem, size = 0x12000, scoped, tag = 'internal scratch']
  #allocation2 [shape = 's32[2]{0}', space=sflag, size = 0x8, scoped, tag = 'scratch operand']
  #allocation3 [shape = 's32[]', space=sflag, size = 0x4, offset = 0, fixed_abs, tag = 'sflag constant byte address 0x0 - dummy sync flag']
  #allocation5 [shape = 's32[]', space=sflag, size = 0x4, offset = 0, fixed_abs, tag = 'sflag constant byte address 0x0 - dummy sync flag']
  %s0 = inlined_call_operand.hbm [shape: f32[3,8,256], index: 0, kind: input, shape index: {}]
  %s1 = inlined_call_operand.hbm [shape: f32[3,2,256], index: 1, kind: output, shape index: {}]
  %s2 = sld [smem:[#allocation0]]
  $region2: #{tpu_custom_call.1} parent=0
    _
  %s4 = ssub.s32 1, %s2
  %s5 = scalar_select 0, %s4, %s2
  $region1: #{tpu_custom_call.1} parent=0
    #allocation4 [shape = 'u32[3]{0}', space=smem, size = 0xc, scoped, tag = 'DMA stride descriptor']
    #allocation6 [shape = 'u32[3]{0}', space=smem, size = 0xc, scoped, tag = 'DMA stride descriptor']
    %s7 = sshll.u32 1, 14
    %s8 = sxor.u32 4294967295, %s7
    %s11 = sshll.u32 3, 24
    %s12 = sxor.u32 4294967295, %s11
    %s13 = sand.u32 0, %s12
    %s15 = sor.u32 %s13, 0
    %18 = sst [smem:[#allocation4]] 128
    %s19 = scalar_lea.smem [#allocation4], 1
    %20 = sst [smem:[%s19]] 32
    %s21 = scalar_lea.smem [#allocation4], 2
    %22 = sst [smem:[%s21]] 1
    %24 = dma.general %s0, 96, %s1, [#allocation2], [#allocation3], [#allocation4], %s15, 0
    %s25 = scalar_lea.hbm %s0, 112
    %s26 = scalar_lea.hbm %s1, 16
    %s27 = scalar_lea.sflag [#allocation2], 1
    %s29 = sshll.u32 1, 14
    %s30 = sxor.u32 4294967295, %s29
    %s33 = sshll.u32 3, 24
    %s34 = sxor.u32 4294967295, %s33
    %s35 = sand.u32 0, %s34
    %s37 = sor.u32 %s35, 0
    %40 = sst [smem:[#allocation6]] 128
    %s41 = scalar_lea.smem [#allocation6], 1
    %42 = sst [smem:[%s41]] 32
    %s43 = scalar_lea.smem [#allocation6], 2
    %44 = sst [smem:[%s43]] 1
    %46 = dma.general %s25, 96, %s26, %s27, [#allocation5], [#allocation6], %s37, 0
    %s47 = smul.u32 3, 1
    %s48 = smul.u32 %s47, 2
    %s49 = sshll.u32 %s48, 4
    %50 = dma.done [#allocation2], %s49
    %s51 = sshll.u32 %s48, 4
    %52 = dma.done %s27, %s51
  %53 = vsyncmov [#allocation2]
  %s54 = vpop.sfrf %53
  %p55 = scmp.eq.s32.totalorder %s54, 0
  %p56 = pneg %p55
  %58 = shalt.err (%p56)
  %s59 = scalar_lea.sflag [#allocation2], 1
  %60 = vsyncmov %s59
  %s61 = vpop.sfrf %60
  %p62 = scmp.eq.s32.totalorder %s61, 0
  %p63 = pneg %p62
  %65 = shalt.err (%p63)

</llo_original>
